<compile_context>
chip_gen: v7x
topology: tpu7x:2x2x1
jax: 0.10.0
libtpu: 0.0.40
codegen_flags: <defaults>
</compile_context>

<pallas_src>
import functools

import jax
import jax.numpy as jnp
from jax import lax
from jax.experimental import pallas as pl
from jax.experimental.pallas import tpu as pltpu


# HIGHEST keeps the f32 correctness check tight; switch to lax.Precision.DEFAULT
# (plus bf16 weights in fold_params) for large-batch deployment on v6e/v7x.
_MATMUL_PRECISION = lax.Precision.HIGHEST


def _round_up(x: int, m: int) -> int:
    return ((x + m - 1) // m) * m


# ---------------------------------------------------------------------------
# Kernel: one fused 2-layer MLP on a (TB, d1+d2) batch tile.
# ---------------------------------------------------------------------------
def _pair_fuse_kernel(x_ref, w_in_ref, b_in_ref, w_out_ref, b_out_ref, out_ref):
    # linear_0 over the (implicit) concat, already folded into w_in / b_in.
    h = (
        jnp.dot(
            x_ref[...],
            w_in_ref[...],
            preferred_element_type=jnp.float32,
            precision=_MATMUL_PRECISION,
        )
        + b_in_ref[...]
    )
    h = jnp.maximum(h, 0.0)  # ReLU (dropout is identity in eval mode)
    # linear_1 -> (lane-padded) output
    out_ref[...] = (
        jnp.dot(
            h,
            w_out_ref[...],
            preferred_element_type=jnp.float32,
            precision=_MATMUL_PRECISION,
        )
        + b_out_ref[...]
    ).astype(out_ref.dtype)


# ---------------------------------------------------------------------------
# Wrapper
# ---------------------------------------------------------------------------
@functools.partial(jax.jit, static_argnames=("out_dim", "block_b"))
def pair_trans_fuse_forward(x1, x2, params, *, out_dim: int, block_b: int = 256):
    """Fused PairTransFuseModel forward. `params` come from fold_params()."""
    w_in = params["w_in"]      # (d1+d2, H_pad)
    b_in = params["b_in"]      # (1, H_pad)
    w_out = params["w_out"]    # (H_pad, O_pad)
    b_out = params["b_out"]    # (1, O_pad)

    B = x1.shape[0]
    d_in = x1.shape[1] + x2.shape[1]
    h_pad = w_in.shape[1]
    o_pad = w_out.shape[1]

    # Single lane-contiguous activation operand (merges the K=d1 and K=d2 matmuls
    # into one K=d1+d2 matmul).
    x_cat = jnp.concatenate([x1, x2], axis=1).astype(w_in.dtype)

    # Batch tiling: pad B up to a multiple of the batch tile (sublane multiple of 8).
    tb = min(block_b, _round_up(B, 8))
    b_pad = _round_up(B, tb)
    if b_pad != B:
        x_cat = jnp.pad(x_cat, ((0, b_pad - B), (0, 0)))

    grid = (pl.cdiv(b_pad, tb),)

    out_padded = pl.pallas_call(
        _pair_fuse_kernel,
        out_shape=jax.ShapeDtypeStruct((b_pad, o_pad), jnp.float32),
        grid=grid,
        in_specs=[
            pl.BlockSpec((tb, d_in), lambda i: (i, 0)),      # activations: tiled on batch
            pl.BlockSpec((d_in, h_pad), lambda i: (0, 0)),   # weights/biases: VMEM-resident
            pl.BlockSpec((1, h_pad), lambda i: (0, 0)),
            pl.BlockSpec((h_pad, o_pad), lambda i: (0, 0)),
            pl.BlockSpec((1, o_pad), lambda i: (0, 0)),
        ],
        out_specs=pl.BlockSpec((tb, o_pad), lambda i: (i, 0)),
        compiler_params=pltpu.CompilerParams(
            dimension_semantics=("parallel",),  # v7x: shard batch across both TCs
        ),
    )(x_cat, w_in, b_in, w_out, b_out)

    # Strip batch padding and the zero lane padding of the output dim (static slice).
    return out_padded[:B, :out_dim]


# ---------------------------------------------------------------------------
# Parameters: raw (matches the torch module) + folded/padded kernel params.
# ---------------------------------------------------------------------------
def init_params(key, d1, d2, fuse_dim, output_dim, hidden_dim=-1):
    """Deterministic synthetic parameters matching the module's __init__ shapes.

    Weights are stored transposed, i.e. (in_features, out_features), so forward is
    x @ W + b.
    """
    # TODO(synk): MiltyModalLinear internals / checkpoint are unavailable; the fuse
    # model is realized as one Linear(d_i -> fuse_dim) per modality (its eval forward).
    input_dim = 2 * fuse_dim + d1 + d2          # use_fuse and use_model (Config.both)
    if hidden_dim == -1:
        hidden_dim = input_dim                   # n_layers = 2 -> dims = [in, hidden, out]

    ks = jax.random.split(key, 8)

    def u(k, shape, fan_in):
        bound = 1.0 / jnp.sqrt(jnp.float32(fan_in))
        return jax.random.uniform(k, shape, jnp.float32, -bound, bound)

    raw = dict(
        # fuse model: per-modality Linear(d_i -> fuse_dim)
        wf1=u(ks[0], (d1, fuse_dim), d1),
        bf1=u(ks[1], (1, fuse_dim), d1),
        wf2=u(ks[2], (d2, fuse_dim), d2),
        bf2=u(ks[3], (1, fuse_dim), d2),
        # layers.linear_0 : Linear(input_dim -> hidden_dim)
        w0=u(ks[4], (input_dim, hidden_dim), input_dim),
        b0=u(ks[5], (1, hidden_dim), input_dim),
        # layers.linear_1 : Linear(hidden_dim -> output_dim)
        w1=u(ks[6], (hidden_dim, output_dim), hidden_dim),
        b1=u(ks[7], (1, output_dim), hidden_dim),
    )
    return raw, input_dim, hidden_dim


def fold_params(raw, d1, d2, fuse_dim, hidden_dim, output_dim, dtype=jnp.float32):
    """One-time host-side fold + lane padding of the weights for the kernel.

    For v6e/v7x large-batch deployment, pass dtype=jnp.bfloat16 to halve weight DMA
    bytes (f32 accumulation is still requested inside the kernel).
    """
    mm = functools.partial(jnp.dot, precision=_MATMUL_PRECISION)

    # Split w0 rows by the concat order [x1_fuse | x2_fuse | x1 | x2].
    w0 = raw["w0"]
    w0_f1 = w0[:fuse_dim]
    w0_f2 = w0[fuse_dim:2 * fuse_dim]
    w0_x1 = w0[2 * fuse_dim:2 * fuse_dim + d1]
    w0_x2 = w0[2 * fuse_dim + d1:]

    # Fold the fuse linears into linear_0 (no nonlinearity in between).
    w_eff_x1 = mm(raw["wf1"], w0_f1) + w0_x1                            # (d1, hidden)
    w_eff_x2 = mm(raw["wf2"], w0_f2) + w0_x2                            # (d2, hidden)
    b_eff = mm(raw["bf1"], w0_f1) + mm(raw["bf2"], w0_f2) + raw["b0"]   # (1, hidden)

    w_in = jnp.concatenate([w_eff_x1, w_eff_x2], axis=0)                # (d1+d2, hidden)

    # Zero-pad hidden and output dims to lane-dense multiples of 128. Padded hidden
    # lanes compute ReLU(0) = 0 and padded output lanes compute 0 + 0, so the padded
    # region is exactly zero and is sliced off in the wrapper.
    h_pad = _round_up(hidden_dim, 128)
    o_pad = _round_up(output_dim, 128)

    w_in = jnp.pad(w_in, ((0, 0), (0, h_pad - hidden_dim)))
    b_in = jnp.pad(b_eff, ((0, 0), (0, h_pad - hidden_dim)))
    w_out = jnp.pad(raw["w1"], ((0, h_pad - hidden_dim), (0, o_pad - output_dim)))
    b_out = jnp.pad(raw["b1"], ((0, 0), (0, o_pad - output_dim)))

    return dict(
        w_in=w_in.astype(dtype),
        b_in=b_in.astype(dtype),
        w_out=w_out.astype(dtype),
        b_out=b_out.astype(dtype),
    )


def reference_forward(x1, x2, raw):
    """Pure-JAX reference mirroring the PyTorch forward (eval mode, unfolded)."""
    mm = functools.partial(jnp.dot, precision=_MATMUL_PRECISION)
    f1 = mm(x1, raw["wf1"]) + raw["bf1"]
    f2 = mm(x2, raw["wf2"]) + raw["bf2"]
    x = jnp.concatenate([f1, f2, x1, x2], axis=1)
    h = jnp.maximum(mm(x, raw["w0"]) + raw["b0"], 0.0)
    return mm(h, raw["w1"]) + raw["b1"]


if __name__ == "__main__":
    # Small shapes consistent with the module: batch=8, input_dim_1=16, input_dim_2=24,
    # fuse_dim=32, output_dim=8, n_layers=2, hidden_dim=-1 (-> hidden = input_dim = 104).
    B, D1, D2, FUSE_DIM, OUT_DIM = 8, 16, 24, 32, 8

    key = jax.random.PRNGKey(0)
    kx1, kx2, kp = jax.random.split(key, 3)
    x1 = jax.random.normal(kx1, (B, D1), jnp.float32)
    x2 = jax.random.normal(kx2, (B, D2), jnp.float32)

    raw, input_dim, hidden_dim = init_params(kp, D1, D2, FUSE_DIM, OUT_DIM)
    params = fold_params(raw, D1, D2, FUSE_DIM, hidden_dim, OUT_DIM, dtype=jnp.float32)

    out = pair_trans_fuse_forward(x1, x2, params, out_dim=OUT_DIM)
    out = jax.block_until_ready(out)

    ref = reference_forward(x1, x2, raw)
    assert out.shape == (B, OUT_DIM)
    assert jnp.allclose(out, ref, atol=1e-3, rtol=1e-3), (
        float(jnp.max(jnp.abs(out - ref)))
    )

    print("KERNEL_OK")
</pallas_src>

<mosaic_0001>
module attributes {stable_mosaic.version = 11 : i64} {
  func.func @_pair_fuse_kernel(%arg0: i32, %arg1: memref<8x40xf32, #tpu.memory_space<vmem>>, %arg2: memref<40x128xf32, #tpu.memory_space<vmem>>, %arg3: memref<1x128xf32, #tpu.memory_space<vmem>>, %arg4: memref<128x128xf32, #tpu.memory_space<vmem>>, %arg5: memref<1x128xf32, #tpu.memory_space<vmem>>, %arg6: memref<8x128xf32, #tpu.memory_space<vmem>>) attributes {dimension_semantics = [#tpu.dimension_semantics<parallel>], iteration_bounds = array<i64: 1>, scalar_prefetch = 0 : i64, scratch_operands = 0 : i64, tpu.core_type = #tpu.core_type<tc>, window_params = [{transform_indices = @transform_0, window_bounds = array<i64: 8, 40>}, {pipeline_mode = #tpu.pipeline_mode<synchronous>, transform_indices = @transform_1, window_bounds = array<i64: 40, 128>}, {pipeline_mode = #tpu.pipeline_mode<synchronous>, transform_indices = @transform_2, window_bounds = array<i64: 1, 128>}, {pipeline_mode = #tpu.pipeline_mode<synchronous>, transform_indices = @transform_3, window_bounds = array<i64: 128, 128>}, {pipeline_mode = #tpu.pipeline_mode<synchronous>, transform_indices = @transform_4, window_bounds = array<i64: 1, 128>}, {transform_indices = @transform_5, window_bounds = array<i64: 8, 128>}]} {
    %c0 = arith.constant 0 : index
    %c0_0 = arith.constant 0 : index
    %0 = vector.load %arg1[%c0, %c0_0] : memref<8x40xf32, #tpu.memory_space<vmem>>, vector<8x40xf32>
    %c0_1 = arith.constant 0 : index
    %c0_2 = arith.constant 0 : index
    %1 = vector.load %arg2[%c0_1, %c0_2] : memref<40x128xf32, #tpu.memory_space<vmem>>, vector<40x128xf32>
    %cst = arith.constant dense<0.000000e+00> : vector<8x128xf32>
    %2 = tpu.matmul %0, %1, %cst {dimension_numbers = #tpu.dot_dimension_numbers<[1], [0], [0], [1], [0, 0, 1, 1], [], []>, precision = #tpu.contract_precision<fp32>} : vector<8x40xf32>, vector<40x128xf32>, vector<8x128xf32> -> vector<8x128xf32>
    %c0_3 = arith.constant 0 : index
    %c0_4 = arith.constant 0 : index
    %3 = vector.load %arg3[%c0_3, %c0_4] : memref<1x128xf32, #tpu.memory_space<vmem>>, vector<1x128xf32>
    %4 = vector.broadcast %3 : vector<1x128xf32> to vector<8x128xf32>
    %5 = arith.addf %2, %4 : vector<8x128xf32>
    %cst_5 = arith.constant 0.000000e+00 : f32
    %6 = vector.broadcast %cst_5 : f32 to vector<8x128xf32>
    %7 = arith.maximumf %5, %6 : vector<8x128xf32>
    %c0_6 = arith.constant 0 : index
    %c0_7 = arith.constant 0 : index
    %8 = vector.load %arg4[%c0_6, %c0_7] : memref<128x128xf32, #tpu.memory_space<vmem>>, vector<128x128xf32>
    %cst_8 = arith.constant dense<0.000000e+00> : vector<8x128xf32>
    %9 = tpu.matmul %7, %8, %cst_8 {dimension_numbers = #tpu.dot_dimension_numbers<[1], [0], [0], [1], [0, 0, 1, 1], [], []>, precision = #tpu.contract_precision<fp32>} : vector<8x128xf32>, vector<128x128xf32>, vector<8x128xf32> -> vector<8x128xf32>
    %c0_9 = arith.constant 0 : index
    %c0_10 = arith.constant 0 : index
    %10 = vector.load %arg5[%c0_9, %c0_10] : memref<1x128xf32, #tpu.memory_space<vmem>>, vector<1x128xf32>
    %11 = vector.broadcast %10 : vector<1x128xf32> to vector<8x128xf32>
    %12 = arith.addf %9, %11 : vector<8x128xf32>
    %c0_11 = arith.constant 0 : index
    %c0_12 = arith.constant 0 : index
    %13 = vector.load %arg6[%c0_11, %c0_12] : memref<8x128xf32, #tpu.memory_space<vmem>>, vector<8x128xf32>
    tpu.vector_store %arg6[%c0_11, %c0_12], %12 {strides = array<i32>} : memref<8x128xf32, #tpu.memory_space<vmem>>, vector<8x128xf32>,
    return
  }
  func.func @transform_0(%arg0: i32) -> (i32, i32) {
    %c0_i32 = arith.constant 0 : i32
    %c0_i32_0 = arith.constant 0 : i32
    return %arg0, %c0_i32 : i32, i32
  }
  func.func @transform_1(%arg0: i32) -> (i32, i32) {
    %c0_i32 = arith.constant 0 : i32
    %c0_i32_0 = arith.constant 0 : i32
    %c0_i32_1 = arith.constant 0 : i32
    return %c0_i32, %c0_i32_0 : i32, i32
  }
  func.func @transform_2(%arg0: i32) -> (i32, i32) {
    %c0_i32 = arith.constant 0 : i32
    %c0_i32_0 = arith.constant 0 : i32
    %c0_i32_1 = arith.constant 0 : i32
    return %c0_i32, %c0_i32_0 : i32, i32
  }
  func.func @transform_3(%arg0: i32) -> (i32, i32) {
    %c0_i32 = arith.constant 0 : i32
    %c0_i32_0 = arith.constant 0 : i32
    %c0_i32_1 = arith.constant 0 : i32
    return %c0_i32, %c0_i32_0 : i32, i32
  }
  func.func @transform_4(%arg0: i32) -> (i32, i32) {
    %c0_i32 = arith.constant 0 : i32
    %c0_i32_0 = arith.constant 0 : i32
    %c0_i32_1 = arith.constant 0 : i32
    return %c0_i32, %c0_i32_0 : i32, i32
  }
  func.func @transform_5(%arg0: i32) -> (i32, i32) {
    %c0_i32 = arith.constant 0 : i32
    %c0_i32_0 = arith.constant 0 : i32
    return %arg0, %c0_i32 : i32, i32
  }
}

</mosaic_0001>

<llo_original>
// kernel: pair_trans_fuse_forward.1
$region0: #{pair_trans_fuse_forward.1}
  #allocation0 [shape = 'u32[]', space=smem, size = 0x4, offset = 0x4, fixed_abs, tag = 'smem constant byte address 0x4 - core index']
  #allocation1 [shape = 'u32[144,128]{1,0:T(1,128)}', space=vmem, size = 0x12000, scoped, tag = 'internal scratch']
  %s0 = inlined_call_operand.vmem [shape: f32[8,40], index: 0, kind: input, shape index: {}]
  %s1 = inlined_call_operand.hbm [shape: f32[40,128], index: 1, kind: input, shape index: {}]
  %s2 = inlined_call_operand.vmem [shape: f32[1,128], index: 2, kind: input, shape index: {}]
  %s3 = inlined_call_operand.hbm [shape: f32[128,128], index: 3, kind: input, shape index: {}]
  %s4 = inlined_call_operand.vmem [shape: f32[1,128], index: 4, kind: input, shape index: {}]
  %s5 = inlined_call_operand.hbm [shape: f32[8,128], index: 5, kind: output, shape index: {}]
  %s6 = sld [smem:[#allocation0]]
  $region38: #{pair_trans_fuse_forward.1} parent=0
    _
  %s8 = ssub.s32 1, %s6
  %s9 = scalar_select 0, %s8, %s6
  $region1: #{pair_trans_fuse_forward.1} parent=0
    #allocation2 [shape = 'u8[20480]{0}', space=vmem, size = 0x5000, scoped, tag = 'input window, operand 1, single buffered']
    #allocation3 [shape = 's32[1]{0}', space=sflag, size = 0x4, scoped, tag = 'scoped memory for pair_trans_fuse_forward.1']
    #allocation4 [shape = 's32[1]{0}', space=sflag, size = 0x4, scoped, tag = 'scoped memory for pair_trans_fuse_forward.1']
    #allocation5 [shape = 'u8[65536]{0}', space=vmem, size = 0x10000, scoped, tag = 'input window, operand 3, single buffered']
    #allocation6 [shape = 's32[1]{0}', space=sflag, size = 0x4, scoped, tag = 'scoped memory for pair_trans_fuse_forward.1']
    #allocation7 [shape = 'u8[4096]{0}', space=vmem, size = 0x1000, scoped, tag = 'output window, operand 0, single buffered']
    %10 = vsyncpa [#allocation3], 0
    %11 = vsyncpa [#allocation6], 0
    %12 = vsyncpa [#allocation4], 0
    // Predicated region
    $region2: #{pair_trans_fuse_forward.1} parent=1 // pred_check
      _
    $region3: #{pair_trans_fuse_forward.1} parent=1 // pred_check_branch
      %14 = sbr.rel (0) target = $region5
    $region4: #{pair_trans_fuse_forward.1} parent=1 // pred_region
      _
    $region5: #{pair_trans_fuse_forward.1} parent=1 // pred_fallthru
      _
    // Predicated region
    $region6: #{pair_trans_fuse_forward.1} parent=1 // pred_check
      _
    $region7: #{pair_trans_fuse_forward.1} parent=1 // pred_check_branch
      %16 = sbr.rel (0) target = $region9
    $region8: #{pair_trans_fuse_forward.1} parent=1 // pred_region
      %s18 = ssub.s32 640, 640
      %19 = vsyncadd [#allocation3], %s18
      %s20 = sshll.u32 [#allocation2], 4
      %s21 = int_to_ptr.vmem [resolvable:$true] %s20
      %26 = dma.hbm_to_vmem [thread:$0]  %s1, 640, %s21, [#allocation3], 128, 128, 8
    $region9: #{pair_trans_fuse_forward.1} parent=1 // pred_fallthru
      _
    // Predicated region
    $region10: #{pair_trans_fuse_forward.1} parent=1 // pred_check
      _
    $region11: #{pair_trans_fuse_forward.1} parent=1 // pred_check_branch
      %28 = sbr.rel (0) target = $region13
    $region12: #{pair_trans_fuse_forward.1} parent=1 // pred_region
      _
    $region13: #{pair_trans_fuse_forward.1} parent=1 // pred_fallthru
      _
    // Predicated region
    $region14: #{pair_trans_fuse_forward.1} parent=1 // pred_check
      _
    $region15: #{pair_trans_fuse_forward.1} parent=1 // pred_check_branch
      %30 = sbr.rel (0) target = $region17
    $region16: #{pair_trans_fuse_forward.1} parent=1 // pred_region
      %s32 = ssub.s32 2048, 2048
      %33 = vsyncadd [#allocation6], %s32
      %s34 = sshll.u32 [#allocation5], 4
      %s35 = int_to_ptr.vmem [resolvable:$true] %s34
      %40 = dma.hbm_to_vmem [thread:$0]  %s3, 2048, %s35, [#allocation6], 128, 128, 8
    $region17: #{pair_trans_fuse_forward.1} parent=1 // pred_fallthru
      _
    // Predicated region
    $region18: #{pair_trans_fuse_forward.1} parent=1 // pred_check
      _
    $region19: #{pair_trans_fuse_forward.1} parent=1 // pred_check_branch
      %42 = sbr.rel (0) target = $region21
    $region20: #{pair_trans_fuse_forward.1} parent=1 // pred_region
      _
    $region21: #{pair_trans_fuse_forward.1} parent=1 // pred_fallthru
      _
    // Predicated region
    $region22: #{pair_trans_fuse_forward.1} parent=1 // pred_check
      _
    $region23: #{pair_trans_fuse_forward.1} parent=1 // pred_check_branch
      %44 = sbr.rel (0) target = $region25
    $region24: #{pair_trans_fuse_forward.1} parent=1 // pred_region
      %45 = dma.done [#allocation3], 640
    $region25: #{pair_trans_fuse_forward.1} parent=1 // pred_fallthru
      _
    // Predicated region
    $region26: #{pair_trans_fuse_forward.1} parent=1 // pred_check
      _
    $region27: #{pair_trans_fuse_forward.1} parent=1 // pred_check_branch
      %47 = sbr.rel (0) target = $region29
    $region28: #{pair_trans_fuse_forward.1} parent=1 // pred_region
      %48 = dma.done [#allocation6], 2048
    $region29: #{pair_trans_fuse_forward.1} parent=1 // pred_fallthru
      _
    %v49 = vld [vmem:[%s0] sm:$0xff]
    %v50 = vld [vmem:[#allocation2] sm:$0xff]
    %v51 = vld [vmem:[#allocation2 + $0x8] sm:$0xff]
    %v52 = vld [vmem:[#allocation2 + $0x10] sm:$0xff]
    %v53 = vld [vmem:[#allocation2 + $0x18] sm:$0xff]
    %v54 = vld [vmem:[#allocation2 + $0x20] sm:$0xff]
    %v55 = vld [vmem:[%s2] sm:$0x1]
    %v57 = vlaneseq
    %v58 = vshrl.u32 %v57, 7
    %v59 = vsub.s32 0, %v58
    %v60 = vrot.slane %v55, %v59
    %vm62 = vcmask 326656
    %v64 = vsel %vm62, %v49, 0
    %66 = vmatprep.subr.mxu0 0.0
    %v67 = vand.u32 %v50, 4294901760
    %68 = vmatpush1.msra.mxu0 %v67
    %69 = vmatprep.subr.mxu0 0.0
    %v70 = vand.u32 %v51, 4294901760
    %71 = vmatpush1.msra.mxu0 %v70
    %72 = vmatprep.subr.mxu0 0.0
    %v73 = vand.u32 %v52, 4294901760
    %74 = vmatpush1.msra.mxu0 %v73
    %75 = vmatprep.subr.mxu0 0.0
    %v76 = vand.u32 %v53, 4294901760
    %77 = vmatpush1.msra.mxu0 %v76
    %78 = vmatprep.subr.mxu0 0.0
    %v79 = vand.u32 %v54, 4294901760
    %80 = vmatpush1.msra.mxu0 %v79
    %81 = vmatprep.subr.mxu0 0.0
    %82 = vmatpush1.msra.mxu0 0.0
    %83 = vmatprep.subr.mxu0 0.0
    %84 = vmatpush1.msra.mxu0 0.0
    %85 = vmatprep.subr.mxu0 0.0
    %86 = vmatpush1.msra.mxu0 0.0
    %87 = vmatprep.subr.mxu0 0.0
    %88 = vmatpush1.msra.mxu0 0.0
    %89 = vmatprep.subr.mxu0 0.0
    %90 = vmatpush1.msra.mxu0 0.0
    %91 = vmatprep.subr.mxu0 0.0
    %92 = vmatpush1.msra.mxu0 0.0
    %93 = vmatprep.subr.mxu0 0.0
    %94 = vmatpush1.msra.mxu0 0.0
    %95 = vmatprep.subr.mxu0 0.0
    %96 = vmatpush1.msra.mxu0 0.0
    %97 = vmatprep.subr.mxu0 0.0
    %98 = vmatpush1.msra.mxu0 0.0
    %99 = vmatprep.subr.mxu0 0.0
    %100 = vmatpush1.msra.mxu0 0.0
    %101 = vmatprep.subr.mxu0 0.0
    %102 = vmatpush1.msra.mxu0 0.0
    %103 = vmatprep.subr.mxu0 0.0
    %104 = vmatpush1.msra.mxu0 0.0
    %105 = vmatprep.subr.mxu0 0.0
    %106 = vmatpush1.msra.mxu0 0.0
    %107 = vmatprep.subr.mxu0 0.0
    %108 = vmatpush1.msra.mxu0 0.0
    %109 = vmatprep.subr.mxu0 0.0
    %110 = vmatpush1.msra.mxu0 0.0
    %111 = vmatprep.subr.mxu0 0.0
    %112 = vmatpush1.msra.mxu0 0.0
    %113 = vmatprep.subr.mxu0 0.0
    %114 = vmatpush1.msra.mxu0 0.0
    %115 = vmatprep.subr.mxu0 0.0
    %116 = vmatpush1.msra.mxu0 0.0
    %117 = vmatprep.subr.mxu0 0.0
    %118 = vmatpush1.msra.mxu0 0.0
    %119 = vmatprep.subr.mxu0 0.0
    %120 = vmatpush1.msra.mxu0 0.0
    %121 = vmatprep.subr.mxu0 0.0
    %122 = vmatpush1.msra.mxu0 0.0
    %123 = vmatprep.subr.mxu0 0.0
    %124 = vmatpush1.msra.mxu0 0.0
    %125 = vmatprep.subr.mxu0 0.0
    %126 = vmatpush1.msra.mxu0 0.0
    %127 = vmatprep.subr.mxu0 0.0
    %128 = vmatpush1.msra.mxu0 0.0
    %129 = vmatprep.subr.mxu0 0.0
    %130 = vmatpush1.msra.mxu0 0.0
    %131 = vmatprep.subr.mxu0 0.0
    %132 = vmatpush1.msra.mxu0 0.0
    %133 = vmatprep.subr.mxu0 0.0
    %134 = vmatpush1.msra.mxu0 0.0
    %135 = vmatprep.mubr.f32.mxu0 0.0
    %v136 = vand.u32 %v64, 4294901760
    %v137 = vsub.f32 %v64, %v136
    %v138 = vand.u32 %v137, 4294901760
    %v139 = vsub.f32 %v137, %v138
    %v140 = vand.u32 %v139, 4294901760
    %141 = vmatmul.mubr.f32.gmra.mrb[0].mxu0 %v140
    %v142 = vpop.f32.mrb[0].mxu0
    %v143 = vadd.f32 %v60, %v142
    %v144 = vpop.f32.mrb[0].mxu0
    %145 = vdwg.mxu0
    %146 = vmatprep.subr.mxu0 0.0
    %v147 = vand.u32 %v50, 4294901760
    %v148 = vsub.f32 %v50, %v147
    %v149 = vand.u32 %v148, 4294901760
    %v150 = vsub.f32 %v148, %v149
    %v151 = vand.u32 %v150, 4294901760
    %152 = vmatpush1.msra.mxu0 %v151
    %153 = vmatprep.subr.mxu0 0.0
    %v154 = vand.u32 %v51, 4294901760
    %v155 = vsub.f32 %v51, %v154
    %v156 = vand.u32 %v155, 4294901760
    %v157 = vsub.f32 %v155, %v156
    %v158 = vand.u32 %v157, 4294901760
    %159 = vmatpush1.msra.mxu0 %v158
    %160 = vmatprep.subr.mxu0 0.0
    %v161 = vand.u32 %v52, 4294901760
    %v162 = vsub.f32 %v52, %v161
    %v163 = vand.u32 %v162, 4294901760
    %v164 = vsub.f32 %v162, %v163
    %v165 = vand.u32 %v164, 4294901760
    %166 = vmatpush1.msra.mxu0 %v165
    %167 = vmatprep.subr.mxu0 0.0
    %v168 = vand.u32 %v53, 4294901760
    %v169 = vsub.f32 %v53, %v168
    %v170 = vand.u32 %v169, 4294901760
    %v171 = vsub.f32 %v169, %v170
    %v172 = vand.u32 %v171, 4294901760
    %173 = vmatpush1.msra.mxu0 %v172
    %174 = vmatprep.subr.mxu0 0.0
    %v175 = vand.u32 %v54, 4294901760
    %v176 = vsub.f32 %v54, %v175
    %v177 = vand.u32 %v176, 4294901760
    %v178 = vsub.f32 %v176, %v177
    %v179 = vand.u32 %v178, 4294901760
    %180 = vmatpush1.msra.mxu0 %v179
    %181 = vmatprep.subr.mxu0 0.0
    %182 = vmatpush1.msra.mxu0 0.0
    %183 = vmatprep.subr.mxu0 0.0
    %184 = vmatpush1.msra.mxu0 0.0
    %185 = vmatprep.subr.mxu0 0.0
    %186 = vmatpush1.msra.mxu0 0.0
    %187 = vmatprep.subr.mxu0 0.0
    %188 = vmatpush1.msra.mxu0 0.0
    %189 = vmatprep.subr.mxu0 0.0
    %190 = vmatpush1.msra.mxu0 0.0
    %191 = vmatprep.subr.mxu0 0.0
    %192 = vmatpush1.msra.mxu0 0.0
    %193 = vmatprep.subr.mxu0 0.0
    %194 = vmatpush1.msra.mxu0 0.0
    %195 = vmatprep.subr.mxu0 0.0
    %196 = vmatpush1.msra.mxu0 0.0
    %197 = vmatprep.subr.mxu0 0.0
    %198 = vmatpush1.msra.mxu0 0.0
    %199 = vmatprep.subr.mxu0 0.0
    %200 = vmatpush1.msra.mxu0 0.0
    %201 = vmatprep.subr.mxu0 0.0
    %202 = vmatpush1.msra.mxu0 0.0
    %203 = vmatprep.subr.mxu0 0.0
    %204 = vmatpush1.msra.mxu0 0.0
    %205 = vmatprep.subr.mxu0 0.0
    %206 = vmatpush1.msra.mxu0 0.0
    %207 = vmatprep.subr.mxu0 0.0
    %208 = vmatpush1.msra.mxu0 0.0
    %209 = vmatprep.subr.mxu0 0.0
    %210 = vmatpush1.msra.mxu0 0.0
    %211 = vmatprep.subr.mxu0 0.0
    %212 = vmatpush1.msra.mxu0 0.0
    %213 = vmatprep.subr.mxu0 0.0
    %214 = vmatpush1.msra.mxu0 0.0
    %215 = vmatprep.subr.mxu0 0.0
    %216 = vmatpush1.msra.mxu0 0.0
    %217 = vmatprep.subr.mxu0 0.0
    %218 = vmatpush1.msra.mxu0 0.0
    %219 = vmatprep.subr.mxu0 0.0
    %220 = vmatpush1.msra.mxu0 0.0
    %221 = vmatprep.subr.mxu0 0.0
    %222 = vmatpush1.msra.mxu0 0.0
    %223 = vmatprep.subr.mxu0 0.0
    %224 = vmatpush1.msra.mxu0 0.0
    %225 = vmatprep.subr.mxu0 0.0
    %226 = vmatpush1.msra.mxu0 0.0
    %227 = vmatprep.subr.mxu0 0.0
    %228 = vmatpush1.msra.mxu0 0.0
    %229 = vmatprep.subr.mxu0 0.0
    %230 = vmatpush1.msra.mxu0 0.0
    %231 = vmatprep.subr.mxu0 0.0
    %232 = vmatpush1.msra.mxu0 0.0
    %233 = vmatprep.subr.mxu0 0.0
    %234 = vmatpush1.msra.mxu0 0.0
    %235 = vmatprep.mubr.f32.mxu0 0.0
    %v236 = vand.u32 %v64, 4294901760
    %237 = vmatmul.mubr.f32.gmra.mrb[0].mxu0 %v236
    %v238 = vpop.f32.mrb[0].mxu0
    %v239 = vadd.f32 %v143, %v238
    %v240 = vpop.f32.mrb[0].mxu0
    %241 = vdwg.mxu0
    %242 = vmatprep.subr.mxu0 0.0
    %v243 = vand.u32 %v50, 4294901760
    %v244 = vsub.f32 %v50, %v243
    %245 = vmatpush1.msra.mxu0 %v244
    %246 = vmatprep.subr.mxu0 0.0
    %v247 = vand.u32 %v51, 4294901760
    %v248 = vsub.f32 %v51, %v247
    %249 = vmatpush1.msra.mxu0 %v248
    %250 = vmatprep.subr.mxu0 0.0
    %v251 = vand.u32 %v52, 4294901760
    %v252 = vsub.f32 %v52, %v251
    %253 = vmatpush1.msra.mxu0 %v252
    %254 = vmatprep.subr.mxu0 0.0
    %v255 = vand.u32 %v53, 4294901760
    %v256 = vsub.f32 %v53, %v255
    %257 = vmatpush1.msra.mxu0 %v256
    %258 = vmatprep.subr.mxu0 0.0
    %v259 = vand.u32 %v54, 4294901760
    %v260 = vsub.f32 %v54, %v259
    %261 = vmatpush1.msra.mxu0 %v260
    %262 = vmatprep.subr.mxu0 0.0
    %263 = vmatpush1.msra.mxu0 0.0
    %264 = vmatprep.subr.mxu0 0.0
    %265 = vmatpush1.msra.mxu0 0.0
    %266 = vmatprep.subr.mxu0 0.0
    %267 = vmatpush1.msra.mxu0 0.0
    %268 = vmatprep.subr.mxu0 0.0
    %269 = vmatpush1.msra.mxu0 0.0
    %270 = vmatprep.subr.mxu0 0.0
    %271 = vmatpush1.msra.mxu0 0.0
    %272 = vmatprep.subr.mxu0 0.0
    %273 = vmatpush1.msra.mxu0 0.0
    %274 = vmatprep.subr.mxu0 0.0
    %275 = vmatpush1.msra.mxu0 0.0
    %276 = vmatprep.subr.mxu0 0.0
    %277 = vmatpush1.msra.mxu0 0.0
    %278 = vmatprep.subr.mxu0 0.0
    %279 = vmatpush1.msra.mxu0 0.0
    %280 = vmatprep.subr.mxu0 0.0
    %281 = vmatpush1.msra.mxu0 0.0
    %282 = vmatprep.subr.mxu0 0.0
    %283 = vmatpush1.msra.mxu0 0.0
    %284 = vmatprep.subr.mxu0 0.0
    %285 = vmatpush1.msra.mxu0 0.0
    %286 = vmatprep.subr.mxu0 0.0
    %287 = vmatpush1.msra.mxu0 0.0
    %288 = vmatprep.subr.mxu0 0.0
    %289 = vmatpush1.msra.mxu0 0.0
    %290 = vmatprep.subr.mxu0 0.0
    %291 = vmatpush1.msra.mxu0 0.0
    %292 = vmatprep.subr.mxu0 0.0
    %293 = vmatpush1.msra.mxu0 0.0
    %294 = vmatprep.subr.mxu0 0.0
    %295 = vmatpush1.msra.mxu0 0.0
    %296 = vmatprep.subr.mxu0 0.0
    %297 = vmatpush1.msra.mxu0 0.0
    %298 = vmatprep.subr.mxu0 0.0
    %299 = vmatpush1.msra.mxu0 0.0
    %300 = vmatprep.subr.mxu0 0.0
    %301 = vmatpush1.msra.mxu0 0.0
    %302 = vmatprep.subr.mxu0 0.0
    %303 = vmatpush1.msra.mxu0 0.0
    %304 = vmatprep.subr.mxu0 0.0
    %305 = vmatpush1.msra.mxu0 0.0
    %306 = vmatprep.subr.mxu0 0.0
    %307 = vmatpush1.msra.mxu0 0.0
    %308 = vmatprep.subr.mxu0 0.0
    %309 = vmatpush1.msra.mxu0 0.0
    %310 = vmatprep.subr.mxu0 0.0
    %311 = vmatpush1.msra.mxu0 0.0
    %312 = vmatprep.subr.mxu0 0.0
    %313 = vmatpush1.msra.mxu0 0.0
    %314 = vmatprep.subr.mxu0 0.0
    %315 = vmatpush1.msra.mxu0 0.0
    %316 = vmatprep.mubr.f32.mxu0 0.0
    %v317 = vand.u32 %v64, 4294901760
    %v318 = vsub.f32 %v64, %v317
    %319 = vmatmul.mubr.f32.gmra.mrb[0].mxu0 %v318
    %v320 = vpop.f32.mrb[0].mxu0
    %v321 = vadd.f32 %v239, %v320
    %v322 = vpop.f32.mrb[0].mxu0
    %323 = vdwg.mxu0
    %324 = vmatprep.subr.mxu0 0.0
    %v325 = vand.u32 %v50, 4294901760
    %326 = vmatpush1.msra.mxu0 %v325
    %327 = vmatprep.subr.mxu0 0.0
    %v328 = vand.u32 %v51, 4294901760
    %329 = vmatpush1.msra.mxu0 %v328
    %330 = vmatprep.subr.mxu0 0.0
    %v331 = vand.u32 %v52, 4294901760
    %332 = vmatpush1.msra.mxu0 %v331
    %333 = vmatprep.subr.mxu0 0.0
    %v334 = vand.u32 %v53, 4294901760
    %335 = vmatpush1.msra.mxu0 %v334
    %336 = vmatprep.subr.mxu0 0.0
    %v337 = vand.u32 %v54, 4294901760
    %338 = vmatpush1.msra.mxu0 %v337
    %339 = vmatprep.subr.mxu0 0.0
    %340 = vmatpush1.msra.mxu0 0.0
    %341 = vmatprep.subr.mxu0 0.0
    %342 = vmatpush1.msra.mxu0 0.0
    %343 = vmatprep.subr.mxu0 0.0
    %344 = vmatpush1.msra.mxu0 0.0
    %345 = vmatprep.subr.mxu0 0.0
    %346 = vmatpush1.msra.mxu0 0.0
    %347 = vmatprep.subr.mxu0 0.0
    %348 = vmatpush1.msra.mxu0 0.0
    %349 = vmatprep.subr.mxu0 0.0
    %350 = vmatpush1.msra.mxu0 0.0
    %351 = vmatprep.subr.mxu0 0.0
    %352 = vmatpush1.msra.mxu0 0.0
    %353 = vmatprep.subr.mxu0 0.0
    %354 = vmatpush1.msra.mxu0 0.0
    %355 = vmatprep.subr.mxu0 0.0
    %356 = vmatpush1.msra.mxu0 0.0
    %357 = vmatprep.subr.mxu0 0.0
    %358 = vmatpush1.msra.mxu0 0.0
    %359 = vmatprep.subr.mxu0 0.0
    %360 = vmatpush1.msra.mxu0 0.0
    %361 = vmatprep.subr.mxu0 0.0
    %362 = vmatpush1.msra.mxu0 0.0
    %363 = vmatprep.subr.mxu0 0.0
    %364 = vmatpush1.msra.mxu0 0.0
    %365 = vmatprep.subr.mxu0 0.0
    %366 = vmatpush1.msra.mxu0 0.0
    %367 = vmatprep.subr.mxu0 0.0
    %368 = vmatpush1.msra.mxu0 0.0
    %369 = vmatprep.subr.mxu0 0.0
    %370 = vmatpush1.msra.mxu0 0.0
    %371 = vmatprep.subr.mxu0 0.0
    %372 = vmatpush1.msra.mxu0 0.0
    %373 = vmatprep.subr.mxu0 0.0
    %374 = vmatpush1.msra.mxu0 0.0
    %375 = vmatprep.subr.mxu0 0.0
    %376 = vmatpush1.msra.mxu0 0.0
    %377 = vmatprep.subr.mxu0 0.0
    %378 = vmatpush1.msra.mxu0 0.0
    %379 = vmatprep.subr.mxu0 0.0
    %380 = vmatpush1.msra.mxu0 0.0
    %381 = vmatprep.subr.mxu0 0.0
    %382 = vmatpush1.msra.mxu0 0.0
    %383 = vmatprep.subr.mxu0 0.0
    %384 = vmatpush1.msra.mxu0 0.0
    %385 = vmatprep.subr.mxu0 0.0
    %386 = vmatpush1.msra.mxu0 0.0
    %387 = vmatprep.subr.mxu0 0.0
    %388 = vmatpush1.msra.mxu0 0.0
    %389 = vmatprep.subr.mxu0 0.0
    %390 = vmatpush1.msra.mxu0 0.0
    %391 = vmatprep.subr.mxu0 0.0
    %392 = vmatpush1.msra.mxu0 0.0
    %393 = vmatprep.mubr.f32.mxu0 0.0
    %v394 = vand.u32 %v64, 4294901760
    %v395 = vsub.f32 %v64, %v394
    %v396 = vand.u32 %v395, 4294901760
    %397 = vmatmul.mubr.f32.gmra.mrb[0].mxu0 %v396
    %v398 = vpop.f32.mrb[0].mxu0
    %v399 = vadd.f32 %v321, %v398
    %v400 = vpop.f32.mrb[0].mxu0
    %401 = vdwg.mxu0
    %402 = vmatprep.subr.mxu0 0.0
    %v403 = vand.u32 %v50, 4294901760
    %v404 = vsub.f32 %v50, %v403
    %v405 = vand.u32 %v404, 4294901760
    %406 = vmatpush1.msra.mxu0 %v405
    %407 = vmatprep.subr.mxu0 0.0
    %v408 = vand.u32 %v51, 4294901760
    %v409 = vsub.f32 %v51, %v408
    %v410 = vand.u32 %v409, 4294901760
    %411 = vmatpush1.msra.mxu0 %v410
    %412 = vmatprep.subr.mxu0 0.0
    %v413 = vand.u32 %v52, 4294901760
    %v414 = vsub.f32 %v52, %v413
    %v415 = vand.u32 %v414, 4294901760
    %416 = vmatpush1.msra.mxu0 %v415
    %417 = vmatprep.subr.mxu0 0.0
    %v418 = vand.u32 %v53, 4294901760
    %v419 = vsub.f32 %v53, %v418
    %v420 = vand.u32 %v419, 4294901760
    %421 = vmatpush1.msra.mxu0 %v420
    %422 = vmatprep.subr.mxu0 0.0
    %v423 = vand.u32 %v54, 4294901760
    %v424 = vsub.f32 %v54, %v423
    %v425 = vand.u32 %v424, 4294901760
    %426 = vmatpush1.msra.mxu0 %v425
    %427 = vmatprep.subr.mxu0 0.0
    %428 = vmatpush1.msra.mxu0 0.0
    %429 = vmatprep.subr.mxu0 0.0
    %430 = vmatpush1.msra.mxu0 0.0
    %431 = vmatprep.subr.mxu0 0.0
    %432 = vmatpush1.msra.mxu0 0.0
    %433 = vmatprep.subr.mxu0 0.0
    %434 = vmatpush1.msra.mxu0 0.0
    %435 = vmatprep.subr.mxu0 0.0
    %436 = vmatpush1.msra.mxu0 0.0
    %437 = vmatprep.subr.mxu0 0.0
    %438 = vmatpush1.msra.mxu0 0.0
    %439 = vmatprep.subr.mxu0 0.0
    %440 = vmatpush1.msra.mxu0 0.0
    %441 = vmatprep.subr.mxu0 0.0
    %442 = vmatpush1.msra.mxu0 0.0
    %443 = vmatprep.subr.mxu0 0.0
    %444 = vmatpush1.msra.mxu0 0.0
    %445 = vmatprep.subr.mxu0 0.0
    %446 = vmatpush1.msra.mxu0 0.0
    %447 = vmatprep.subr.mxu0 0.0
    %448 = vmatpush1.msra.mxu0 0.0
    %449 = vmatprep.subr.mxu0 0.0
    %450 = vmatpush1.msra.mxu0 0.0
    %451 = vmatprep.subr.mxu0 0.0
    %452 = vmatpush1.msra.mxu0 0.0
    %453 = vmatprep.subr.mxu0 0.0
    %454 = vmatpush1.msra.mxu0 0.0
    %455 = vmatprep.subr.mxu0 0.0
    %456 = vmatpush1.msra.mxu0 0.0
    %457 = vmatprep.subr.mxu0 0.0
    %458 = vmatpush1.msra.mxu0 0.0
    %459 = vmatprep.subr.mxu0 0.0
    %460 = vmatpush1.msra.mxu0 0.0
    %461 = vmatprep.subr.mxu0 0.0
    %462 = vmatpush1.msra.mxu0 0.0
    %463 = vmatprep.subr.mxu0 0.0
    %464 = vmatpush1.msra.mxu0 0.0
    %465 = vmatprep.subr.mxu0 0.0
    %466 = vmatpush1.msra.mxu0 0.0
    %467 = vmatprep.subr.mxu0 0.0
    %468 = vmatpush1.msra.mxu0 0.0
    %469 = vmatprep.subr.mxu0 0.0
    %470 = vmatpush1.msra.mxu0 0.0
    %471 = vmatprep.subr.mxu0 0.0
    %472 = vmatpush1.msra.mxu0 0.0
    %473 = vmatprep.subr.mxu0 0.0
    %474 = vmatpush1.msra.mxu0 0.0
    %475 = vmatprep.subr.mxu0 0.0
    %476 = vmatpush1.msra.mxu0 0.0
    %477 = vmatprep.subr.mxu0 0.0
    %478 = vmatpush1.msra.mxu0 0.0
    %479 = vmatprep.subr.mxu0 0.0
    %480 = vmatpush1.msra.mxu0 0.0
    %481 = vmatprep.mubr.f32.mxu0 0.0
    %v482 = vand.u32 %v64, 4294901760
    %483 = vmatmul.mubr.f32.gmra.mrb[0].mxu0 %v482
    %v484 = vpop.f32.mrb[0].mxu0
    %v485 = vadd.f32 %v399, %v484
    %v486 = vpop.f32.mrb[0].mxu0
    %487 = vdwg.mxu0
    %488 = vmatprep.subr.mxu0 0.0
    %v489 = vand.u32 %v50, 4294901760
    %490 = vmatpush1.msra.mxu0 %v489
    %491 = vmatprep.subr.mxu0 0.0
    %v492 = vand.u32 %v51, 4294901760
    %493 = vmatpush1.msra.mxu0 %v492
    %494 = vmatprep.subr.mxu0 0.0
    %v495 = vand.u32 %v52, 4294901760
    %496 = vmatpush1.msra.mxu0 %v495
    %497 = vmatprep.subr.mxu0 0.0
    %v498 = vand.u32 %v53, 4294901760
    %499 = vmatpush1.msra.mxu0 %v498
    %500 = vmatprep.subr.mxu0 0.0
    %v501 = vand.u32 %v54, 4294901760
    %502 = vmatpush1.msra.mxu0 %v501
    %503 = vmatprep.subr.mxu0 0.0
    %504 = vmatpush1.msra.mxu0 0.0
    %505 = vmatprep.subr.mxu0 0.0
    %506 = vmatpush1.msra.mxu0 0.0
    %507 = vmatprep.subr.mxu0 0.0
    %508 = vmatpush1.msra.mxu0 0.0
    %509 = vmatprep.subr.mxu0 0.0
    %510 = vmatpush1.msra.mxu0 0.0
    %511 = vmatprep.subr.mxu0 0.0
    %512 = vmatpush1.msra.mxu0 0.0
    %513 = vmatprep.subr.mxu0 0.0
    %514 = vmatpush1.msra.mxu0 0.0
    %515 = vmatprep.subr.mxu0 0.0
    %516 = vmatpush1.msra.mxu0 0.0
    %517 = vmatprep.subr.mxu0 0.0
    %518 = vmatpush1.msra.mxu0 0.0
    %519 = vmatprep.subr.mxu0 0.0
    %520 = vmatpush1.msra.mxu0 0.0
    %521 = vmatprep.subr.mxu0 0.0
    %522 = vmatpush1.msra.mxu0 0.0
    %523 = vmatprep.subr.mxu0 0.0
    %524 = vmatpush1.msra.mxu0 0.0
    %525 = vmatprep.subr.mxu0 0.0
    %526 = vmatpush1.msra.mxu0 0.0
    %527 = vmatprep.subr.mxu0 0.0
    %528 = vmatpush1.msra.mxu0 0.0
    %529 = vmatprep.subr.mxu0 0.0
    %530 = vmatpush1.msra.mxu0 0.0
    %531 = vmatprep.subr.mxu0 0.0
    %532 = vmatpush1.msra.mxu0 0.0
    %533 = vmatprep.subr.mxu0 0.0
    %534 = vmatpush1.msra.mxu0 0.0
    %535 = vmatprep.subr.mxu0 0.0
    %536 = vmatpush1.msra.mxu0 0.0
    %537 = vmatprep.subr.mxu0 0.0
    %538 = vmatpush1.msra.mxu0 0.0
    %539 = vmatprep.subr.mxu0 0.0
    %540 = vmatpush1.msra.mxu0 0.0
    %541 = vmatprep.subr.mxu0 0.0
    %542 = vmatpush1.msra.mxu0 0.0
    %543 = vmatprep.subr.mxu0 0.0
    %544 = vmatpush1.msra.mxu0 0.0
    %545 = vmatprep.subr.mxu0 0.0
    %546 = vmatpush1.msra.mxu0 0.0
    %547 = vmatprep.subr.mxu0 0.0
    %548 = vmatpush1.msra.mxu0 0.0
    %549 = vmatprep.subr.mxu0 0.0
    %550 = vmatpush1.msra.mxu0 0.0
    %551 = vmatprep.subr.mxu0 0.0
    %552 = vmatpush1.msra.mxu0 0.0
    %553 = vmatprep.subr.mxu0 0.0
    %554 = vmatpush1.msra.mxu0 0.0
    %555 = vmatprep.subr.mxu0 0.0
    %556 = vmatpush1.msra.mxu0 0.0
    %557 = vmatprep.mubr.f32.mxu0 0.0
    %v558 = vand.u32 %v64, 4294901760
    %559 = vmatmul.mubr.f32.gmra.mrb[0].mxu0 %v558
    %v560 = vpop.f32.mrb[0].mxu0
    %v561 = vadd.f32 %v485, %v560
    %v562 = vpop.f32.mrb[0].mxu0
    %563 = vdwg.mxu0
    %v564 = vmax.f32 %v561, 0.0
    %v565 = vld [vmem:[#allocation5] sm:$0xff]
    %v566 = vld [vmem:[#allocation5 + $0x8] sm:$0xff]
    %v567 = vld [vmem:[#allocation5 + $0x10] sm:$0xff]
    %v568 = vld [vmem:[#allocation5 + $0x18] sm:$0xff]
    %v569 = vld [vmem:[#allocation5 + $0x20] sm:$0xff]
    %v570 = vld [vmem:[#allocation5 + $0x28] sm:$0xff]
    %v571 = vld [vmem:[#allocation5 + $0x30] sm:$0xff]
    %v572 = vld [vmem:[#allocation5 + $0x38] sm:$0xff]
    %v573 = vld [vmem:[#allocation5 + $0x40] sm:$0xff]
    %v574 = vld [vmem:[#allocation5 + $0x48] sm:$0xff]
    %v575 = vld [vmem:[#allocation5 + $0x50] sm:$0xff]
    %v576 = vld [vmem:[#allocation5 + $0x58] sm:$0xff]
    %v577 = vld [vmem:[#allocation5 + $0x60] sm:$0xff]
    %v578 = vld [vmem:[#allocation5 + $0x68] sm:$0xff]
    %v579 = vld [vmem:[#allocation5 + $0x70] sm:$0xff]
    %v580 = vld [vmem:[#allocation5 + $0x78] sm:$0xff]
    %v581 = vld [vmem:[%s4] sm:$0x1]
    %v583 = vlaneseq
    %v584 = vshrl.u32 %v583, 7
    %v585 = vsub.s32 0, %v584
    %v586 = vrot.slane %v581, %v585
    %588 = vmatprep.subr.mxu0 0.0
    %v589 = vand.u32 %v565, 4294901760
    %590 = vmatpush1.msra.mxu0 %v589
    %591 = vmatprep.subr.mxu0 0.0
    %v592 = vand.u32 %v566, 4294901760
    %593 = vmatpush1.msra.mxu0 %v592
    %594 = vmatprep.subr.mxu0 0.0
    %v595 = vand.u32 %v567, 4294901760
    %596 = vmatpush1.msra.mxu0 %v595
    %597 = vmatprep.subr.mxu0 0.0
    %v598 = vand.u32 %v568, 4294901760
    %599 = vmatpush1.msra.mxu0 %v598
    %600 = vmatprep.subr.mxu0 0.0
    %v601 = vand.u32 %v569, 4294901760
    %602 = vmatpush1.msra.mxu0 %v601
    %603 = vmatprep.subr.mxu0 0.0
    %v604 = vand.u32 %v570, 4294901760
    %605 = vmatpush1.msra.mxu0 %v604
    %606 = vmatprep.subr.mxu0 0.0
    %v607 = vand.u32 %v571, 4294901760
    %608 = vmatpush1.msra.mxu0 %v607
    %609 = vmatprep.subr.mxu0 0.0
    %v610 = vand.u32 %v572, 4294901760
    %611 = vmatpush1.msra.mxu0 %v610
    %612 = vmatprep.subr.mxu0 0.0
    %v613 = vand.u32 %v573, 4294901760
    %614 = vmatpush1.msra.mxu0 %v613
    %615 = vmatprep.subr.mxu0 0.0
    %v616 = vand.u32 %v574, 4294901760
    %617 = vmatpush1.msra.mxu0 %v616
    %618 = vmatprep.subr.mxu0 0.0
    %v619 = vand.u32 %v575, 4294901760
    %620 = vmatpush1.msra.mxu0 %v619
    %621 = vmatprep.subr.mxu0 0.0
    %v622 = vand.u32 %v576, 4294901760
    %623 = vmatpush1.msra.mxu0 %v622
    %624 = vmatprep.subr.mxu0 0.0
    %v625 = vand.u32 %v577, 4294901760
    %626 = vmatpush1.msra.mxu0 %v625
    %627 = vmatprep.subr.mxu0 0.0
    %v628 = vand.u32 %v578, 4294901760
    %629 = vmatpush1.msra.mxu0 %v628
    %630 = vmatprep.subr.mxu0 0.0
    %v631 = vand.u32 %v579, 4294901760
    %632 = vmatpush1.msra.mxu0 %v631
    %633 = vmatprep.subr.mxu0 0.0
    %v634 = vand.u32 %v580, 4294901760
    %635 = vmatpush1.msra.mxu0 %v634
    %636 = vmatprep.subr.mxu0 0.0
    %637 = vmatpush1.msra.mxu0 0.0
    %638 = vmatprep.subr.mxu0 0.0
    %639 = vmatpush1.msra.mxu0 0.0
    %640 = vmatprep.subr.mxu0 0.0
    %641 = vmatpush1.msra.mxu0 0.0
    %642 = vmatprep.subr.mxu0 0.0
    %643 = vmatpush1.msra.mxu0 0.0
    %644 = vmatprep.subr.mxu0 0.0
    %645 = vmatpush1.msra.mxu0 0.0
    %646 = vmatprep.subr.mxu0 0.0
    %647 = vmatpush1.msra.mxu0 0.0
    %648 = vmatprep.subr.mxu0 0.0
    %649 = vmatpush1.msra.mxu0 0.0
    %650 = vmatprep.subr.mxu0 0.0
    %651 = vmatpush1.msra.mxu0 0.0
    %652 = vmatprep.subr.mxu0 0.0
    %653 = vmatpush1.msra.mxu0 0.0
    %654 = vmatprep.subr.mxu0 0.0
    %655 = vmatpush1.msra.mxu0 0.0
    %656 = vmatprep.subr.mxu0 0.0
    %657 = vmatpush1.msra.mxu0 0.0
    %658 = vmatprep.subr.mxu0 0.0
    %659 = vmatpush1.msra.mxu0 0.0
    %660 = vmatprep.subr.mxu0 0.0
    %661 = vmatpush1.msra.mxu0 0.0
    %662 = vmatprep.subr.mxu0 0.0
    %663 = vmatpush1.msra.mxu0 0.0
    %664 = vmatprep.subr.mxu0 0.0
    %665 = vmatpush1.msra.mxu0 0.0
    %666 = vmatprep.subr.mxu0 0.0
    %667 = vmatpush1.msra.mxu0 0.0
    %668 = vmatprep.mubr.f32.mxu0 0.0
    %v669 = vand.u32 %v564, 4294901760
    %v670 = vsub.f32 %v564, %v669
    %v671 = vand.u32 %v670, 4294901760
    %v672 = vsub.f32 %v670, %v671
    %v673 = vand.u32 %v672, 4294901760
    %674 = vmatmul.mubr.f32.gmra.mrb[0].mxu0 %v673
    %v675 = vpop.f32.mrb[0].mxu0
    %v676 = vadd.f32 %v586, %v675
    %v677 = vpop.f32.mrb[0].mxu0
    %678 = vdwg.mxu0
    %679 = vmatprep.subr.mxu0 0.0
    %v680 = vand.u32 %v565, 4294901760
    %v681 = vsub.f32 %v565, %v680
    %v682 = vand.u32 %v681, 4294901760
    %v683 = vsub.f32 %v681, %v682
    %v684 = vand.u32 %v683, 4294901760
    %685 = vmatpush1.msra.mxu0 %v684
    %686 = vmatprep.subr.mxu0 0.0
    %v687 = vand.u32 %v566, 4294901760
    %v688 = vsub.f32 %v566, %v687
    %v689 = vand.u32 %v688, 4294901760
    %v690 = vsub.f32 %v688, %v689
    %v691 = vand.u32 %v690, 4294901760
    %692 = vmatpush1.msra.mxu0 %v691
    %693 = vmatprep.subr.mxu0 0.0
    %v694 = vand.u32 %v567, 4294901760
    %v695 = vsub.f32 %v567, %v694
    %v696 = vand.u32 %v695, 4294901760
    %v697 = vsub.f32 %v695, %v696
    %v698 = vand.u32 %v697, 4294901760
    %699 = vmatpush1.msra.mxu0 %v698
    %700 = vmatprep.subr.mxu0 0.0
    %v701 = vand.u32 %v568, 4294901760
    %v702 = vsub.f32 %v568, %v701
    %v703 = vand.u32 %v702, 4294901760
    %v704 = vsub.f32 %v702, %v703
    %v705 = vand.u32 %v704, 4294901760
    %706 = vmatpush1.msra.mxu0 %v705
    %707 = vmatprep.subr.mxu0 0.0
    %v708 = vand.u32 %v569, 4294901760
    %v709 = vsub.f32 %v569, %v708
    %v710 = vand.u32 %v709, 4294901760
    %v711 = vsub.f32 %v709, %v710
    %v712 = vand.u32 %v711, 4294901760
    %713 = vmatpush1.msra.mxu0 %v712
    %714 = vmatprep.subr.mxu0 0.0
    %v715 = vand.u32 %v570, 4294901760
    %v716 = vsub.f32 %v570, %v715
    %v717 = vand.u32 %v716, 4294901760
    %v718 = vsub.f32 %v716, %v717
    %v719 = vand.u32 %v718, 4294901760
    %720 = vmatpush1.msra.mxu0 %v719
    %721 = vmatprep.subr.mxu0 0.0
    %v722 = vand.u32 %v571, 4294901760
    %v723 = vsub.f32 %v571, %v722
    %v724 = vand.u32 %v723, 4294901760
    %v725 = vsub.f32 %v723, %v724
    %v726 = vand.u32 %v725, 4294901760
    %727 = vmatpush1.msra.mxu0 %v726
    %728 = vmatprep.subr.mxu0 0.0
    %v729 = vand.u32 %v572, 4294901760
    %v730 = vsub.f32 %v572, %v729
    %v731 = vand.u32 %v730, 4294901760
    %v732 = vsub.f32 %v730, %v731
    %v733 = vand.u32 %v732, 4294901760
    %734 = vmatpush1.msra.mxu0 %v733
    %735 = vmatprep.subr.mxu0 0.0
    %v736 = vand.u32 %v573, 4294901760
    %v737 = vsub.f32 %v573, %v736
    %v738 = vand.u32 %v737, 4294901760
    %v739 = vsub.f32 %v737, %v738
    %v740 = vand.u32 %v739, 4294901760
    %741 = vmatpush1.msra.mxu0 %v740
    %742 = vmatprep.subr.mxu0 0.0
    %v743 = vand.u32 %v574, 4294901760
    %v744 = vsub.f32 %v574, %v743
    %v745 = vand.u32 %v744, 4294901760
    %v746 = vsub.f32 %v744, %v745
    %v747 = vand.u32 %v746, 4294901760
    %748 = vmatpush1.msra.mxu0 %v747
    %749 = vmatprep.subr.mxu0 0.0
    %v750 = vand.u32 %v575, 4294901760
    %v751 = vsub.f32 %v575, %v750
    %v752 = vand.u32 %v751, 4294901760
    %v753 = vsub.f32 %v751, %v752
    %v754 = vand.u32 %v753, 4294901760
    %755 = vmatpush1.msra.mxu0 %v754
    %756 = vmatprep.subr.mxu0 0.0
    %v757 = vand.u32 %v576, 4294901760
    %v758 = vsub.f32 %v576, %v757
    %v759 = vand.u32 %v758, 4294901760
    %v760 = vsub.f32 %v758, %v759
    %v761 = vand.u32 %v760, 4294901760
    %762 = vmatpush1.msra.mxu0 %v761
    %763 = vmatprep.subr.mxu0 0.0
    %v764 = vand.u32 %v577, 4294901760
    %v765 = vsub.f32 %v577, %v764
    %v766 = vand.u32 %v765, 4294901760
    %v767 = vsub.f32 %v765, %v766
    %v768 = vand.u32 %v767, 4294901760
    %769 = vmatpush1.msra.mxu0 %v768
    %770 = vmatprep.subr.mxu0 0.0
    %v771 = vand.u32 %v578, 4294901760
    %v772 = vsub.f32 %v578, %v771
    %v773 = vand.u32 %v772, 4294901760
    %v774 = vsub.f32 %v772, %v773
    %v775 = vand.u32 %v774, 4294901760
    %776 = vmatpush1.msra.mxu0 %v775
    %777 = vmatprep.subr.mxu0 0.0
    %v778 = vand.u32 %v579, 4294901760
    %v779 = vsub.f32 %v579, %v778
    %v780 = vand.u32 %v779, 4294901760
    %v781 = vsub.f32 %v779, %v780
    %v782 = vand.u32 %v781, 4294901760
    %783 = vmatpush1.msra.mxu0 %v782
    %784 = vmatprep.subr.mxu0 0.0
    %v785 = vand.u32 %v580, 4294901760
    %v786 = vsub.f32 %v580, %v785
    %v787 = vand.u32 %v786, 4294901760
    %v788 = vsub.f32 %v786, %v787
    %v789 = vand.u32 %v788, 4294901760
    %790 = vmatpush1.msra.mxu0 %v789
    %791 = vmatprep.subr.mxu0 0.0
    %792 = vmatpush1.msra.mxu0 0.0
    %793 = vmatprep.subr.mxu0 0.0
    %794 = vmatpush1.msra.mxu0 0.0
    %795 = vmatprep.subr.mxu0 0.0
    %796 = vmatpush1.msra.mxu0 0.0
    %797 = vmatprep.subr.mxu0 0.0
    %798 = vmatpush1.msra.mxu0 0.0
    %799 = vmatprep.subr.mxu0 0.0
    %800 = vmatpush1.msra.mxu0 0.0
    %801 = vmatprep.subr.mxu0 0.0
    %802 = vmatpush1.msra.mxu0 0.0
    %803 = vmatprep.subr.mxu0 0.0
    %804 = vmatpush1.msra.mxu0 0.0
    %805 = vmatprep.subr.mxu0 0.0
    %806 = vmatpush1.msra.mxu0 0.0
    %807 = vmatprep.subr.mxu0 0.0
    %808 = vmatpush1.msra.mxu0 0.0
    %809 = vmatprep.subr.mxu0 0.0
    %810 = vmatpush1.msra.mxu0 0.0
    %811 = vmatprep.subr.mxu0 0.0
    %812 = vmatpush1.msra.mxu0 0.0
    %813 = vmatprep.subr.mxu0 0.0
    %814 = vmatpush1.msra.mxu0 0.0
    %815 = vmatprep.subr.mxu0 0.0
    %816 = vmatpush1.msra.mxu0 0.0
    %817 = vmatprep.subr.mxu0 0.0
    %818 = vmatpush1.msra.mxu0 0.0
    %819 = vmatprep.subr.mxu0 0.0
    %820 = vmatpush1.msra.mxu0 0.0
    %821 = vmatprep.subr.mxu0 0.0
    %822 = vmatpush1.msra.mxu0 0.0
    %823 = vmatprep.mubr.f32.mxu0 0.0
    %v824 = vand.u32 %v564, 4294901760
    %825 = vmatmul.mubr.f32.gmra.mrb[0].mxu0 %v824
    %v826 = vpop.f32.mrb[0].mxu0
    %v827 = vadd.f32 %v676, %v826
    %v828 = vpop.f32.mrb[0].mxu0
    %829 = vdwg.mxu0
    %830 = vmatprep.subr.mxu0 0.0
    %v831 = vand.u32 %v565, 4294901760
    %v832 = vsub.f32 %v565, %v831
    %833 = vmatpush1.msra.mxu0 %v832
    %834 = vmatprep.subr.mxu0 0.0
    %v835 = vand.u32 %v566, 4294901760
    %v836 = vsub.f32 %v566, %v835
    %837 = vmatpush1.msra.mxu0 %v836
    %838 = vmatprep.subr.mxu0 0.0
    %v839 = vand.u32 %v567, 4294901760
    %v840 = vsub.f32 %v567, %v839
    %841 = vmatpush1.msra.mxu0 %v840
    %842 = vmatprep.subr.mxu0 0.0
    %v843 = vand.u32 %v568, 4294901760
    %v844 = vsub.f32 %v568, %v843
    %845 = vmatpush1.msra.mxu0 %v844
    %846 = vmatprep.subr.mxu0 0.0
    %v847 = vand.u32 %v569, 4294901760
    %v848 = vsub.f32 %v569, %v847
    %849 = vmatpush1.msra.mxu0 %v848
    %850 = vmatprep.subr.mxu0 0.0
    %v851 = vand.u32 %v570, 4294901760
    %v852 = vsub.f32 %v570, %v851
    %853 = vmatpush1.msra.mxu0 %v852
    %854 = vmatprep.subr.mxu0 0.0
    %v855 = vand.u32 %v571, 4294901760
    %v856 = vsub.f32 %v571, %v855
    %857 = vmatpush1.msra.mxu0 %v856
    %858 = vmatprep.subr.mxu0 0.0
    %v859 = vand.u32 %v572, 4294901760
    %v860 = vsub.f32 %v572, %v859
    %861 = vmatpush1.msra.mxu0 %v860
    %862 = vmatprep.subr.mxu0 0.0
    %v863 = vand.u32 %v573, 4294901760
    %v864 = vsub.f32 %v573, %v863
    %865 = vmatpush1.msra.mxu0 %v864
    %866 = vmatprep.subr.mxu0 0.0
    %v867 = vand.u32 %v574, 4294901760
    %v868 = vsub.f32 %v574, %v867
    %869 = vmatpush1.msra.mxu0 %v868
    %870 = vmatprep.subr.mxu0 0.0
    %v871 = vand.u32 %v575, 4294901760
    %v872 = vsub.f32 %v575, %v871
    %873 = vmatpush1.msra.mxu0 %v872
    %874 = vmatprep.subr.mxu0 0.0
    %v875 = vand.u32 %v576, 4294901760
    %v876 = vsub.f32 %v576, %v875
    %877 = vmatpush1.msra.mxu0 %v876
    %878 = vmatprep.subr.mxu0 0.0
    %v879 = vand.u32 %v577, 4294901760
    %v880 = vsub.f32 %v577, %v879
    %881 = vmatpush1.msra.mxu0 %v880
    %882 = vmatprep.subr.mxu0 0.0
    %v883 = vand.u32 %v578, 4294901760
    %v884 = vsub.f32 %v578, %v883
    %885 = vmatpush1.msra.mxu0 %v884
    %886 = vmatprep.subr.mxu0 0.0
    %v887 = vand.u32 %v579, 4294901760
    %v888 = vsub.f32 %v579, %v887
    %889 = vmatpush1.msra.mxu0 %v888
    %890 = vmatprep.subr.mxu0 0.0
    %v891 = vand.u32 %v580, 4294901760
    %v892 = vsub.f32 %v580, %v891
    %893 = vmatpush1.msra.mxu0 %v892
    %894 = vmatprep.subr.mxu0 0.0
    %895 = vmatpush1.msra.mxu0 0.0
    %896 = vmatprep.subr.mxu0 0.0
    %897 = vmatpush1.msra.mxu0 0.0
    %898 = vmatprep.subr.mxu0 0.0
    %899 = vmatpush1.msra.mxu0 0.0
    %900 = vmatprep.subr.mxu0 0.0
    %901 = vmatpush1.msra.mxu0 0.0
    %902 = vmatprep.subr.mxu0 0.0
    %903 = vmatpush1.msra.mxu0 0.0
    %904 = vmatprep.subr.mxu0 0.0
    %905 = vmatpush1.msra.mxu0 0.0
    %906 = vmatprep.subr.mxu0 0.0
    %907 = vmatpush1.msra.mxu0 0.0
    %908 = vmatprep.subr.mxu0 0.0
    %909 = vmatpush1.msra.mxu0 0.0
    %910 = vmatprep.subr.mxu0 0.0
    %911 = vmatpush1.msra.mxu0 0.0
    %912 = vmatprep.subr.mxu0 0.0
    %913 = vmatpush1.msra.mxu0 0.0
    %914 = vmatprep.subr.mxu0 0.0
    %915 = vmatpush1.msra.mxu0 0.0
    %916 = vmatprep.subr.mxu0 0.0
    %917 = vmatpush1.msra.mxu0 0.0
    %918 = vmatprep.subr.mxu0 0.0
    %919 = vmatpush1.msra.mxu0 0.0
    %920 = vmatprep.subr.mxu0 0.0
    %921 = vmatpush1.msra.mxu0 0.0
    %922 = vmatprep.subr.mxu0 0.0
    %923 = vmatpush1.msra.mxu0 0.0
    %924 = vmatprep.subr.mxu0 0.0
    %925 = vmatpush1.msra.mxu0 0.0
    %926 = vmatprep.mubr.f32.mxu0 0.0
    %v927 = vand.u32 %v564, 4294901760
    %v928 = vsub.f32 %v564, %v927
    %929 = vmatmul.mubr.f32.gmra.mrb[0].mxu0 %v928
    %v930 = vpop.f32.mrb[0].mxu0
    %v931 = vadd.f32 %v827, %v930
    %v932 = vpop.f32.mrb[0].mxu0
    %933 = vdwg.mxu0
    %934 = vmatprep.subr.mxu0 0.0
    %v935 = vand.u32 %v565, 4294901760
    %936 = vmatpush1.msra.mxu0 %v935
    %937 = vmatprep.subr.mxu0 0.0
    %v938 = vand.u32 %v566, 4294901760
    %939 = vmatpush1.msra.mxu0 %v938
    %940 = vmatprep.subr.mxu0 0.0
    %v941 = vand.u32 %v567, 4294901760
    %942 = vmatpush1.msra.mxu0 %v941
    %943 = vmatprep.subr.mxu0 0.0
    %v944 = vand.u32 %v568, 4294901760
    %945 = vmatpush1.msra.mxu0 %v944
    %946 = vmatprep.subr.mxu0 0.0
    %v947 = vand.u32 %v569, 4294901760
    %948 = vmatpush1.msra.mxu0 %v947
    %949 = vmatprep.subr.mxu0 0.0
    %v950 = vand.u32 %v570, 4294901760
    %951 = vmatpush1.msra.mxu0 %v950
    %952 = vmatprep.subr.mxu0 0.0
    %v953 = vand.u32 %v571, 4294901760
    %954 = vmatpush1.msra.mxu0 %v953
    %955 = vmatprep.subr.mxu0 0.0
    %v956 = vand.u32 %v572, 4294901760
    %957 = vmatpush1.msra.mxu0 %v956
    %958 = vmatprep.subr.mxu0 0.0
    %v959 = vand.u32 %v573, 4294901760
    %960 = vmatpush1.msra.mxu0 %v959
    %961 = vmatprep.subr.mxu0 0.0
    %v962 = vand.u32 %v574, 4294901760
    %963 = vmatpush1.msra.mxu0 %v962
    %964 = vmatprep.subr.mxu0 0.0
    %v965 = vand.u32 %v575, 4294901760
    %966 = vmatpush1.msra.mxu0 %v965
    %967 = vmatprep.subr.mxu0 0.0
    %v968 = vand.u32 %v576, 4294901760
    %969 = vmatpush1.msra.mxu0 %v968
    %970 = vmatprep.subr.mxu0 0.0
    %v971 = vand.u32 %v577, 4294901760
    %972 = vmatpush1.msra.mxu0 %v971
    %973 = vmatprep.subr.mxu0 0.0
    %v974 = vand.u32 %v578, 4294901760
    %975 = vmatpush1.msra.mxu0 %v974
    %976 = vmatprep.subr.mxu0 0.0
    %v977 = vand.u32 %v579, 4294901760
    %978 = vmatpush1.msra.mxu0 %v977
    %979 = vmatprep.subr.mxu0 0.0
    %v980 = vand.u32 %v580, 4294901760
    %981 = vmatpush1.msra.mxu0 %v980
    %982 = vmatprep.subr.mxu0 0.0
    %983 = vmatpush1.msra.mxu0 0.0
    %984 = vmatprep.subr.mxu0 0.0
    %985 = vmatpush1.msra.mxu0 0.0
    %986 = vmatprep.subr.mxu0 0.0
    %987 = vmatpush1.msra.mxu0 0.0
    %988 = vmatprep.subr.mxu0 0.0
    %989 = vmatpush1.msra.mxu0 0.0
    %990 = vmatprep.subr.mxu0 0.0
    %991 = vmatpush1.msra.mxu0 0.0
    %992 = vmatprep.subr.mxu0 0.0
    %993 = vmatpush1.msra.mxu0 0.0
    %994 = vmatprep.subr.mxu0 0.0
    %995 = vmatpush1.msra.mxu0 0.0
    %996 = vmatprep.subr.mxu0 0.0
    %997 = vmatpush1.msra.mxu0 0.0
    %998 = vmatprep.subr.mxu0 0.0
    %999 = vmatpush1.msra.mxu0 0.0
    %1000 = vmatprep.subr.mxu0 0.0
    %1001 = vmatpush1.msra.mxu0 0.0
    %1002 = vmatprep.subr.mxu0 0.0
    %1003 = vmatpush1.msra.mxu0 0.0
    %1004 = vmatprep.subr.mxu0 0.0
    %1005 = vmatpush1.msra.mxu0 0.0
    %1006 = vmatprep.subr.mxu0 0.0
    %1007 = vmatpush1.msra.mxu0 0.0
    %1008 = vmatprep.subr.mxu0 0.0
    %1009 = vmatpush1.msra.mxu0 0.0
    %1010 = vmatprep.subr.mxu0 0.0
    %1011 = vmatpush1.msra.mxu0 0.0
    %1012 = vmatprep.subr.mxu0 0.0
    %1013 = vmatpush1.msra.mxu0 0.0
    %1014 = vmatprep.mubr.f32.mxu0 0.0
    %v1015 = vand.u32 %v564, 4294901760
    %v1016 = vsub.f32 %v564, %v1015
    %v1017 = vand.u32 %v1016, 4294901760
    %1018 = vmatmul.mubr.f32.gmra.mrb[0].mxu0 %v1017
    %v1019 = vpop.f32.mrb[0].mxu0
    %v1020 = vadd.f32 %v931, %v1019
    %v1021 = vpop.f32.mrb[0].mxu0
    %1022 = vdwg.mxu0
    %1023 = vmatprep.subr.mxu0 0.0
    %v1024 = vand.u32 %v565, 4294901760
    %v1025 = vsub.f32 %v565, %v1024
    %v1026 = vand.u32 %v1025, 4294901760
    %1027 = vmatpush1.msra.mxu0 %v1026
    %1028 = vmatprep.subr.mxu0 0.0
    %v1029 = vand.u32 %v566, 4294901760
    %v1030 = vsub.f32 %v566, %v1029
    %v1031 = vand.u32 %v1030, 4294901760
    %1032 = vmatpush1.msra.mxu0 %v1031
    %1033 = vmatprep.subr.mxu0 0.0
    %v1034 = vand.u32 %v567, 4294901760
    %v1035 = vsub.f32 %v567, %v1034
    %v1036 = vand.u32 %v1035, 4294901760
    %1037 = vmatpush1.msra.mxu0 %v1036
    %1038 = vmatprep.subr.mxu0 0.0
    %v1039 = vand.u32 %v568, 4294901760
    %v1040 = vsub.f32 %v568, %v1039
    %v1041 = vand.u32 %v1040, 4294901760
    %1042 = vmatpush1.msra.mxu0 %v1041
    %1043 = vmatprep.subr.mxu0 0.0
    %v1044 = vand.u32 %v569, 4294901760
    %v1045 = vsub.f32 %v569, %v1044
    %v1046 = vand.u32 %v1045, 4294901760
    %1047 = vmatpush1.msra.mxu0 %v1046
    %1048 = vmatprep.subr.mxu0 0.0
    %v1049 = vand.u32 %v570, 4294901760
    %v1050 = vsub.f32 %v570, %v1049
    %v1051 = vand.u32 %v1050, 4294901760
    %1052 = vmatpush1.msra.mxu0 %v1051
    %1053 = vmatprep.subr.mxu0 0.0
    %v1054 = vand.u32 %v571, 4294901760
    %v1055 = vsub.f32 %v571, %v1054
    %v1056 = vand.u32 %v1055, 4294901760
    %1057 = vmatpush1.msra.mxu0 %v1056
    %1058 = vmatprep.subr.mxu0 0.0
    %v1059 = vand.u32 %v572, 4294901760
    %v1060 = vsub.f32 %v572, %v1059
    %v1061 = vand.u32 %v1060, 4294901760
    %1062 = vmatpush1.msra.mxu0 %v1061
    %1063 = vmatprep.subr.mxu0 0.0
    %v1064 = vand.u32 %v573, 4294901760
    %v1065 = vsub.f32 %v573, %v1064
    %v1066 = vand.u32 %v1065, 4294901760
    %1067 = vmatpush1.msra.mxu0 %v1066
    %1068 = vmatprep.subr.mxu0 0.0
    %v1069 = vand.u32 %v574, 4294901760
    %v1070 = vsub.f32 %v574, %v1069
    %v1071 = vand.u32 %v1070, 4294901760
    %1072 = vmatpush1.msra.mxu0 %v1071
    %1073 = vmatprep.subr.mxu0 0.0
    %v1074 = vand.u32 %v575, 4294901760
    %v1075 = vsub.f32 %v575, %v1074
    %v1076 = vand.u32 %v1075, 4294901760
    %1077 = vmatpush1.msra.mxu0 %v1076
    %1078 = vmatprep.subr.mxu0 0.0
    %v1079 = vand.u32 %v576, 4294901760
    %v1080 = vsub.f32 %v576, %v1079
    %v1081 = vand.u32 %v1080, 4294901760
    %1082 = vmatpush1.msra.mxu0 %v1081
    %1083 = vmatprep.subr.mxu0 0.0
    %v1084 = vand.u32 %v577, 4294901760
    %v1085 = vsub.f32 %v577, %v1084
    %v1086 = vand.u32 %v1085, 4294901760
    %1087 = vmatpush1.msra.mxu0 %v1086
    %1088 = vmatprep.subr.mxu0 0.0
    %v1089 = vand.u32 %v578, 4294901760
    %v1090 = vsub.f32 %v578, %v1089
    %v1091 = vand.u32 %v1090, 4294901760
    %1092 = vmatpush1.msra.mxu0 %v1091
    %1093 = vmatprep.subr.mxu0 0.0
    %v1094 = vand.u32 %v579, 4294901760
    %v1095 = vsub.f32 %v579, %v1094
    %v1096 = vand.u32 %v1095, 4294901760
    %1097 = vmatpush1.msra.mxu0 %v1096
    %1098 = vmatprep.subr.mxu0 0.0
    %v1099 = vand.u32 %v580, 4294901760
    %v1100 = vsub.f32 %v580, %v1099
    %v1101 = vand.u32 %v1100, 4294901760
    %1102 = vmatpush1.msra.mxu0 %v1101
    %1103 = vmatprep.subr.mxu0 0.0
    %1104 = vmatpush1.msra.mxu0 0.0
    %1105 = vmatprep.subr.mxu0 0.0
    %1106 = vmatpush1.msra.mxu0 0.0
    %1107 = vmatprep.subr.mxu0 0.0
    %1108 = vmatpush1.msra.mxu0 0.0
    %1109 = vmatprep.subr.mxu0 0.0
    %1110 = vmatpush1.msra.mxu0 0.0
    %1111 = vmatprep.subr.mxu0 0.0
    %1112 = vmatpush1.msra.mxu0 0.0
    %1113 = vmatprep.subr.mxu0 0.0
    %1114 = vmatpush1.msra.mxu0 0.0
    %1115 = vmatprep.subr.mxu0 0.0
    %1116 = vmatpush1.msra.mxu0 0.0
    %1117 = vmatprep.subr.mxu0 0.0
    %1118 = vmatpush1.msra.mxu0 0.0
    %1119 = vmatprep.subr.mxu0 0.0
    %1120 = vmatpush1.msra.mxu0 0.0
    %1121 = vmatprep.subr.mxu0 0.0
    %1122 = vmatpush1.msra.mxu0 0.0
    %1123 = vmatprep.subr.mxu0 0.0
    %1124 = vmatpush1.msra.mxu0 0.0
    %1125 = vmatprep.subr.mxu0 0.0
    %1126 = vmatpush1.msra.mxu0 0.0
    %1127 = vmatprep.subr.mxu0 0.0
    %1128 = vmatpush1.msra.mxu0 0.0
    %1129 = vmatprep.subr.mxu0 0.0
    %1130 = vmatpush1.msra.mxu0 0.0
    %1131 = vmatprep.subr.mxu0 0.0
    %1132 = vmatpush1.msra.mxu0 0.0
    %1133 = vmatprep.subr.mxu0 0.0
    %1134 = vmatpush1.msra.mxu0 0.0
    %1135 = vmatprep.mubr.f32.mxu0 0.0
    %v1136 = vand.u32 %v564, 4294901760
    %1137 = vmatmul.mubr.f32.gmra.mrb[0].mxu0 %v1136
    %v1138 = vpop.f32.mrb[0].mxu0
    %v1139 = vadd.f32 %v1020, %v1138
    %v1140 = vpop.f32.mrb[0].mxu0
    %1141 = vdwg.mxu0
    %1142 = vmatprep.subr.mxu0 0.0
    %v1143 = vand.u32 %v565, 4294901760
    %1144 = vmatpush1.msra.mxu0 %v1143
    %1145 = vmatprep.subr.mxu0 0.0
    %v1146 = vand.u32 %v566, 4294901760
    %1147 = vmatpush1.msra.mxu0 %v1146
    %1148 = vmatprep.subr.mxu0 0.0
    %v1149 = vand.u32 %v567, 4294901760
    %1150 = vmatpush1.msra.mxu0 %v1149
    %1151 = vmatprep.subr.mxu0 0.0
    %v1152 = vand.u32 %v568, 4294901760
    %1153 = vmatpush1.msra.mxu0 %v1152
    %1154 = vmatprep.subr.mxu0 0.0
    %v1155 = vand.u32 %v569, 4294901760
    %1156 = vmatpush1.msra.mxu0 %v1155
    %1157 = vmatprep.subr.mxu0 0.0
    %v1158 = vand.u32 %v570, 4294901760
    %1159 = vmatpush1.msra.mxu0 %v1158
    %1160 = vmatprep.subr.mxu0 0.0
    %v1161 = vand.u32 %v571, 4294901760
    %1162 = vmatpush1.msra.mxu0 %v1161
    %1163 = vmatprep.subr.mxu0 0.0
    %v1164 = vand.u32 %v572, 4294901760
    %1165 = vmatpush1.msra.mxu0 %v1164
    %1166 = vmatprep.subr.mxu0 0.0
    %v1167 = vand.u32 %v573, 4294901760
    %1168 = vmatpush1.msra.mxu0 %v1167
    %1169 = vmatprep.subr.mxu0 0.0
    %v1170 = vand.u32 %v574, 4294901760
    %1171 = vmatpush1.msra.mxu0 %v1170
    %1172 = vmatprep.subr.mxu0 0.0
    %v1173 = vand.u32 %v575, 4294901760
    %1174 = vmatpush1.msra.mxu0 %v1173
    %1175 = vmatprep.subr.mxu0 0.0
    %v1176 = vand.u32 %v576, 4294901760
    %1177 = vmatpush1.msra.mxu0 %v1176
    %1178 = vmatprep.subr.mxu0 0.0
    %v1179 = vand.u32 %v577, 4294901760
    %1180 = vmatpush1.msra.mxu0 %v1179
    %1181 = vmatprep.subr.mxu0 0.0
    %v1182 = vand.u32 %v578, 4294901760
    %1183 = vmatpush1.msra.mxu0 %v1182
    %1184 = vmatprep.subr.mxu0 0.0
    %v1185 = vand.u32 %v579, 4294901760
    %1186 = vmatpush1.msra.mxu0 %v1185
    %1187 = vmatprep.subr.mxu0 0.0
    %v1188 = vand.u32 %v580, 4294901760
    %1189 = vmatpush1.msra.mxu0 %v1188
    %1190 = vmatprep.subr.mxu0 0.0
    %1191 = vmatpush1.msra.mxu0 0.0
    %1192 = vmatprep.subr.mxu0 0.0
    %1193 = vmatpush1.msra.mxu0 0.0
    %1194 = vmatprep.subr.mxu0 0.0
    %1195 = vmatpush1.msra.mxu0 0.0
    %1196 = vmatprep.subr.mxu0 0.0
    %1197 = vmatpush1.msra.mxu0 0.0
    %1198 = vmatprep.subr.mxu0 0.0
    %1199 = vmatpush1.msra.mxu0 0.0
    %1200 = vmatprep.subr.mxu0 0.0
    %1201 = vmatpush1.msra.mxu0 0.0
    %1202 = vmatprep.subr.mxu0 0.0
    %1203 = vmatpush1.msra.mxu0 0.0
    %1204 = vmatprep.subr.mxu0 0.0
    %1205 = vmatpush1.msra.mxu0 0.0
    %1206 = vmatprep.subr.mxu0 0.0
    %1207 = vmatpush1.msra.mxu0 0.0
    %1208 = vmatprep.subr.mxu0 0.0
    %1209 = vmatpush1.msra.mxu0 0.0
    %1210 = vmatprep.subr.mxu0 0.0
    %1211 = vmatpush1.msra.mxu0 0.0
    %1212 = vmatprep.subr.mxu0 0.0
    %1213 = vmatpush1.msra.mxu0 0.0
    %1214 = vmatprep.subr.mxu0 0.0
    %1215 = vmatpush1.msra.mxu0 0.0
    %1216 = vmatprep.subr.mxu0 0.0
    %1217 = vmatpush1.msra.mxu0 0.0
    %1218 = vmatprep.subr.mxu0 0.0
    %1219 = vmatpush1.msra.mxu0 0.0
    %1220 = vmatprep.subr.mxu0 0.0
    %1221 = vmatpush1.msra.mxu0 0.0
    %1222 = vmatprep.mubr.f32.mxu0 0.0
    %v1223 = vand.u32 %v564, 4294901760
    %1224 = vmatmul.mubr.f32.gmra.mrb[0].mxu0 %v1223
    %v1225 = vpop.f32.mrb[0].mxu0
    %v1226 = vadd.f32 %v1139, %v1225
    %v1227 = vpop.f32.mrb[0].mxu0
    %1228 = vdwg.mxu0
    %1229 = vst [vmem:[#allocation7] sm:$0xff] %v1226
    // Predicated region
    $region30: #{pair_trans_fuse_forward.1} parent=1 // pred_check
      _
    $region31: #{pair_trans_fuse_forward.1} parent=1 // pred_check_branch
      %1231 = sbr.rel (0) target = $region33
    $region32: #{pair_trans_fuse_forward.1} parent=1 // pred_region
      %s1233 = ssub.s32 128, 128
      %1234 = vsyncadd [#allocation4], %s1233
      %s1236 = sshll.u32 [#allocation7], 4
      %s1237 = int_to_ptr.vmem [resolvable:$true] %s1236
      %1239 = dma.vmem_to_hbm [thread:$0]  %s1237, 128, %s5, [#allocation4]
    $region33: #{pair_trans_fuse_forward.1} parent=1 // pred_fallthru
      _
    // Predicated region
    $region34: #{pair_trans_fuse_forward.1} parent=1 // pred_check
      _
    $region35: #{pair_trans_fuse_forward.1} parent=1 // pred_check_branch
      %1241 = sbr.rel (0) target = $region37
    $region36: #{pair_trans_fuse_forward.1} parent=1 // pred_region
      %1242 = dma.done [#allocation4], 128
    $region37: #{pair_trans_fuse_forward.1} parent=1 // pred_fallthru
      _
    %1243 = vsyncpa [#allocation3], 1
    %1244 = vsyncpa [#allocation6], 1
    %1245 = vsyncpa [#allocation4], 1

</llo_original>
